<compile_context>
chip_gen: v5e
topology: v5e:2x2
jax: 0.10.0
libtpu: 0.0.40
codegen_flags: <defaults>
</compile_context>

<pallas_src>
import functools

import jax
import jax.numpy as jnp
from jax.experimental import pallas as pl
from jax.experimental.pallas import tpu as pltpu

_ADJ_STREAM_DTYPE = jnp.bfloat16  # exact for a 0/1 adjacency


# ---------------------------------------------------------------------------
# Kernels
# ---------------------------------------------------------------------------
def _gcn_stage_kernel(adj_ref, x1_ref, w_g2_ref, b_g2_ref, x2_ref):
    """X2 = relu(adj_blk @ x1) @ W_g2 + b_g2 for one (TM, n) row block of adj.

    x1 = feat @ W_g1 + b_g1 is precomputed once in the wrapper (tiny) and kept
    VMEM-resident via a constant index_map.
    """
    adj = adj_ref[...].astype(jnp.float32)  # bf16 -> f32 upcast (exact for 0/1)
    g = jnp.dot(adj, x1_ref[...], preferred_element_type=jnp.float32)
    g = jnp.maximum(g, 0.0)
    # dropout == identity (inference mode).
    x2 = jnp.dot(g, w_g2_ref[...], preferred_element_type=jnp.float32) + b_g2_ref[...]
    x2_ref[...] = x2.astype(x2_ref.dtype)


def _encoder_main_kernel(adj_ref, feat_ref, w_left_ref, b_left_ref,
                         w_fe_ref, b_fe_ref, w_mv_left_ref, w_mv_feat_ref,
                         b_mv_ref, out_ref):
    """Per (TM,) row block:
         left = sigmoid(adj_blk @ [W_ae | X2] + [b_ae | 0])   -> (adj_h | gcn_h)
         fh   = sigmoid(feat_blk @ W_fe + b_fe)               ->  feat_h
         out  = left @ W_mv_left + fh @ W_mv_feat + b_mv      ->  (mu | var)
    (For the no-GCN variant, w_left == W_ae and left == adj_h only.)
    """
    adj = adj_ref[...].astype(jnp.float32)  # bf16 -> f32 upcast (exact for 0/1)
    left = jax.nn.sigmoid(
        jnp.dot(adj, w_left_ref[...], preferred_element_type=jnp.float32)
        + b_left_ref[...])
    fh = jax.nn.sigmoid(
        jnp.dot(feat_ref[...], w_fe_ref[...], preferred_element_type=jnp.float32)
        + b_fe_ref[...])
    mv = (jnp.dot(left, w_mv_left_ref[...], preferred_element_type=jnp.float32)
          + jnp.dot(fh, w_mv_feat_ref[...], preferred_element_type=jnp.float32)
          + b_mv_ref[...])
    out_ref[...] = mv.astype(out_ref.dtype)


# ---------------------------------------------------------------------------
# Tiling / VMEM helpers
# ---------------------------------------------------------------------------
def _round_up(x, m):
    return ((x + m - 1) // m) * m


def _vmem_capacity_bytes():
    try:
        info = pltpu.get_tpu_info()
        cap = int(getattr(info, "vmem_capacity_bytes", 0) or 0)
        if cap > 0:
            return cap
    except Exception:
        pass
    return 64 * 1024 * 1024  # conservative fallback (v7x per-core VMEM)


def _pick_row_tile(n, dim, out_w, adj_bytes, fixed_resident, vmem_cap, requested):
    """Largest row tile whose streamed blocks + f32 upcast + residents fit VMEM."""
    if requested is not None:
        tm = int(requested)
    else:
        budget = int(vmem_cap * 0.7) - int(fixed_resident)
        per_row = (2 * n * adj_bytes      # double-buffered adj block (stream dtype)
                   + n * 4                # in-kernel f32 upcast of the adj block
                   + 2 * dim * 4          # double-buffered feature block
                   + 2 * out_w * 4)       # double-buffered output block
        tm = budget // max(per_row, 1) if budget > 0 else 16
        tm = min(tm, 512)                 # per-step overhead is amortized by here
    tm = max(16, (tm // 16) * 16)         # sublane multiple (covers bf16 packing)
    tm = min(tm, _round_up(n, 16))
    return int(tm)


# ---------------------------------------------------------------------------
# Wrapper
# ---------------------------------------------------------------------------
def encoder_forward(adj, features, params, *, add_gcn, tm=None):
    """Encoder forward as row-tiled Pallas kernels; returns (mu, var)."""
    n = adj.shape[0]
    dim = features.shape[1]
    hf = params["w_fe"].shape[1]
    ha = params["w_ae"].shape[1]
    hd = params["w_mu"].shape[1]

    # adj should be stored persistently in the streaming dtype by the caller;
    # the cast here is a no-op in that case.
    adj_s = adj if adj.dtype == _ADJ_STREAM_DTYPE else adj.astype(_ADJ_STREAM_DTYPE)
    feat = features.astype(jnp.float32)
    adj_bytes = jnp.dtype(_ADJ_STREAM_DTYPE).itemsize

    L = ha + (hf if add_gcn else 0)
    vmem_cap = _vmem_capacity_bytes()
    fixed_resident = 4 * (n * L + n * hf + dim * hf + hf * hf
                          + (L + hf) * 2 * hd + 4 * (L + hf + 2 * hd))
    tm = _pick_row_tile(n, dim, 2 * hd, adj_bytes, fixed_resident, vmem_cap, tm)

    # Pad the row count so TM always divides it (never fall back to TM = n).
    n_pad = _round_up(n, tm)
    if n_pad != n:
        adj_s = jnp.pad(adj_s, ((0, n_pad - n), (0, 0)))
        feat = jnp.pad(feat, ((0, n_pad - n), (0, 0)))
    grid = (n_pad // tm,)

    vmem_need = (2 * tm * n * adj_bytes + tm * n * 4
                 + 2 * tm * dim * 4 + 2 * tm * max(2 * hd, hf) * 4
                 + fixed_resident)
    vmem_limit = int(min(0.9 * vmem_cap, max(32 << 20, int(1.5 * vmem_need))))
    cparams = pltpu.CompilerParams(
        dimension_semantics=("parallel",), vmem_limit_bytes=vmem_limit)

    if add_gcn:
        # x1 = feat @ W_g1 + b_g1 hoisted out of the stage-1 kernel (tiny).
        x1 = (jnp.dot(feat[:n], params["w_g1"],
                      precision=jax.lax.Precision.HIGHEST) + params["b_g1"])
        x2 = pl.pallas_call(
            _gcn_stage_kernel,
            out_shape=jax.ShapeDtypeStruct((n_pad, hf), jnp.float32),
            grid_spec=pltpu.PrefetchScalarGridSpec(
                num_scalar_prefetch=0, grid=grid,
                in_specs=[
                    pl.BlockSpec((tm, n), lambda i: (i, 0)),    # adj rows (bf16)
                    pl.BlockSpec((n, hf), lambda i: (0, 0)),    # x1 (resident)
                    pl.BlockSpec((hf, hf), lambda i: (0, 0)),   # W_g2
                    pl.BlockSpec((1, hf), lambda i: (0, 0)),    # b_g2
                ],
                out_specs=pl.BlockSpec((tm, hf), lambda i: (i, 0))),
            compiler_params=cparams,
            cost_estimate=pl.CostEstimate(
                flops=int(2 * n_pad * n * hf + 2 * n_pad * hf * hf),
                transcendentals=0,
                bytes_accessed=int(n_pad * n * adj_bytes + n * hf * 4
                                   + n_pad * hf * 4)),
        )(adj_s, x1, params["w_g2"], params["b_g2"])
        x2 = x2[:n]

        # One adj matmul yields (adj_h | gcn_h): pack [W_ae | X2] column-wise.
        w_left = jnp.concatenate([params["w_ae"], x2], axis=1)             # [n, ha+hf]
        b_left = jnp.concatenate(
            [params["b_ae"], jnp.zeros((1, hf), jnp.float32)], axis=1)     # [1, ha+hf]

        # Reference hidden order is (adj_h, feat_h, gcn_h); in-kernel the left
        # operand is (adj_h | gcn_h) and the right one is feat_h.
        def rows_left(w):
            return jnp.concatenate([w[:ha], w[ha + hf:]], axis=0)          # adj|gcn rows

        def rows_feat(w):
            return w[ha:ha + hf]                                           # feat rows
    else:
        w_left = params["w_ae"]
        b_left = params["b_ae"]

        def rows_left(w):
            return w[:ha]

        def rows_feat(w):
            return w[ha:]

    # Pack mu|var column-wise so a single lane-dense (TM, 2*hd) output is written.
    w_mv_left = jnp.concatenate(
        [rows_left(params["w_mu"]), rows_left(params["w_var"])], axis=1)    # [L, 2hd]
    w_mv_feat = jnp.concatenate(
        [rows_feat(params["w_mu"]), rows_feat(params["w_var"])], axis=1)    # [hf, 2hd]
    b_mv = jnp.concatenate([params["b_mu"], params["b_var"]], axis=1)       # [1, 2hd]

    muvar = pl.pallas_call(
        _encoder_main_kernel,
        out_shape=jax.ShapeDtypeStruct((n_pad, 2 * hd), jnp.float32),
        grid_spec=pltpu.PrefetchScalarGridSpec(
            num_scalar_prefetch=0, grid=grid,
            in_specs=[
                pl.BlockSpec((tm, n), lambda i: (i, 0)),          # adj rows (bf16)
                pl.BlockSpec((tm, dim), lambda i: (i, 0)),        # feature rows
                pl.BlockSpec((n, L), lambda i: (0, 0)),           # [W_ae | X2]
                pl.BlockSpec((1, L), lambda i: (0, 0)),           # [b_ae | 0]
                pl.BlockSpec((dim, hf), lambda i: (0, 0)),        # W_fe
                pl.BlockSpec((1, hf), lambda i: (0, 0)),          # b_fe
                pl.BlockSpec((L, 2 * hd), lambda i: (0, 0)),      # mu|var (left rows)
                pl.BlockSpec((hf, 2 * hd), lambda i: (0, 0)),     # mu|var (feat rows)
                pl.BlockSpec((1, 2 * hd), lambda i: (0, 0)),      # b_mu|b_var
            ],
            out_specs=pl.BlockSpec((tm, 2 * hd), lambda i: (i, 0))),
        compiler_params=cparams,
        cost_estimate=pl.CostEstimate(
            flops=int(2 * n_pad * n * L + 2 * n_pad * dim * hf
                      + 2 * n_pad * (L + hf) * 2 * hd),
            transcendentals=int(n_pad * (L + hf)),
            bytes_accessed=int(n_pad * n * adj_bytes + n_pad * dim * 4
                               + n * L * 4 + n_pad * 2 * hd * 4)),
    )(adj_s, feat, w_left, b_left, params["w_fe"], params["b_fe"],
      w_mv_left, w_mv_feat, b_mv)

    muvar = muvar[:n]
    mu = muvar[:, :hd]
    var = muvar[:, hd:]
    return mu, var


# ---------------------------------------------------------------------------
# Deterministic parameter construction (PyTorch Linear-style init, stored
# pre-transposed as [in, out]; biases as [1, out]).
# ---------------------------------------------------------------------------
def make_params(key, *, n, dim, hf, ha, hd, add_gcn):
    def linear(k, fan_in, fan_out):
        kw, kb = jax.random.split(k)
        bound = 1.0 / float(fan_in) ** 0.5
        w = jax.random.uniform(kw, (fan_in, fan_out), jnp.float32, -bound, bound)
        b = jax.random.uniform(kb, (1, fan_out), jnp.float32, -bound, bound)
        return w, b

    keys = jax.random.split(key, 6)
    p = {}
    p["w_fe"], p["b_fe"] = linear(keys[0], dim, hf)       # features_enc
    p["w_ae"], p["b_ae"] = linear(keys[1], n, ha)         # adj_enc
    cat_dim = ha + (2 * hf if add_gcn else hf)
    p["w_mu"], p["b_mu"] = linear(keys[2], cat_dim, hd)   # mu_layer
    p["w_var"], p["b_var"] = linear(keys[3], cat_dim, hd)  # var_layer
    if add_gcn:
        p["w_g1"], p["b_g1"] = linear(keys[4], dim, hf)   # gcn.linear1
        p["w_g2"], p["b_g2"] = linear(keys[5], hf, hf)    # gcn.linear2
    return p


# ---------------------------------------------------------------------------
# Plain-JAX reference of the same math (torch cat order).
# ---------------------------------------------------------------------------
def ref_forward(adj, features, params, *, add_gcn):
    dot = functools.partial(jnp.dot, precision=jax.lax.Precision.HIGHEST)
    feat_h = jax.nn.sigmoid(dot(features, params["w_fe"]) + params["b_fe"])
    adj_h = jax.nn.sigmoid(dot(adj, params["w_ae"]) + params["b_ae"])
    if add_gcn:
        g = dot(adj, dot(features, params["w_g1"]) + params["b_g1"])
        g = jnp.maximum(g, 0.0)
        g = dot(adj, dot(g, params["w_g2"]) + params["b_g2"])
        gcn_h = jax.nn.sigmoid(g)
        h = jnp.concatenate([adj_h, feat_h, gcn_h], axis=1)
    else:
        h = jnp.concatenate([adj_h, feat_h], axis=1)
    mu = dot(h, params["w_mu"]) + params["b_mu"]
    var = dot(h, params["w_var"]) + params["b_var"]
    return mu, var


if __name__ == "__main__":
    key = jax.random.PRNGKey(0)

    configs = [
        # hf = hidden_dim_enc_feat, ha = hidden_dim_enc_adj, hd = hidden_dim
        dict(n=256, dim=8, hf=16, ha=16, hd=8, add_gcn=True, tm=128),
        dict(n=256, dim=8, hf=16, ha=16, hd=8, add_gcn=False, tm=None),
        # Row count not divisible by the tile -> exercises the padding path.
        dict(n=200, dim=8, hf=16, ha=16, hd=8, add_gcn=False, tm=128),
    ]

    ok = True
    for idx, cfg in enumerate(configs):
        k_adj, k_feat, k_par = jax.random.split(jax.random.fold_in(key, idx), 3)
        n, dim = cfg["n"], cfg["dim"]
        adj = (jax.random.uniform(k_adj, (n, n), jnp.float32) > 0.7).astype(jnp.float32)
        adj = jnp.maximum(adj, adj.T)                    # symmetric 0/1 adjacency
        features = jax.random.normal(k_feat, (n, dim), jnp.float32)
        params = make_params(k_par, n=n, dim=dim, hf=cfg["hf"], ha=cfg["ha"],
                             hd=cfg["hd"], add_gcn=cfg["add_gcn"])

        # Persistent streaming dtype for adj (exact for 0/1 entries).
        adj_stream = adj.astype(_ADJ_STREAM_DTYPE)
        mu, var = encoder_forward(adj_stream, features, params,
                                  add_gcn=cfg["add_gcn"], tm=cfg["tm"])
        jax.block_until_ready((mu, var))

        mu_ref, var_ref = ref_forward(adj, features, params, add_gcn=cfg["add_gcn"])
        ok &= bool(jnp.allclose(mu, mu_ref, atol=2e-3, rtol=2e-3))
        ok &= bool(jnp.allclose(var, var_ref, atol=2e-3, rtol=2e-3))

    assert ok, "mu/var mismatch vs plain-JAX reference"
    print("KERNEL_OK")
</pallas_src>

<mosaic_0001>
module attributes {stable_mosaic.version = 11 : i64} {
  func.func @_gcn_stage_kernel(%arg0: i32, %arg1: memref<128x256xbf16, #tpu.memory_space<vmem>>, %arg2: memref<256x16xf32, #tpu.memory_space<vmem>>, %arg3: memref<16x16xf32, #tpu.memory_space<vmem>>, %arg4: memref<1x16xf32, #tpu.memory_space<vmem>>, %arg5: memref<128x16xf32, #tpu.memory_space<vmem>>) attributes {dimension_semantics = [#tpu.dimension_semantics<parallel>], iteration_bounds = array<i64: 2>, scalar_prefetch = 0 : i64, scratch_operands = 0 : i64, tpu.core_type = #tpu.core_type<tc>, window_params = [{transform_indices = @transform_0, window_bounds = array<i64: 128, 256>}, {pipeline_mode = #tpu.pipeline_mode<synchronous>, transform_indices = @transform_1, window_bounds = array<i64: 256, 16>}, {pipeline_mode = #tpu.pipeline_mode<synchronous>, transform_indices = @transform_2, window_bounds = array<i64: 16, 16>}, {pipeline_mode = #tpu.pipeline_mode<synchronous>, transform_indices = @transform_3, window_bounds = array<i64: 1, 16>}, {transform_indices = @transform_4, window_bounds = array<i64: 128, 16>}]} {
    %c0 = arith.constant 0 : index
    %c0_0 = arith.constant 0 : index
    %0 = vector.load %arg1[%c0, %c0_0] : memref<128x256xbf16, #tpu.memory_space<vmem>>, vector<128x256xbf16>
    %1 = arith.extf %0 : vector<128x256xbf16> to vector<128x256xf32>
    %c0_1 = arith.constant 0 : index
    %c0_2 = arith.constant 0 : index
    %2 = vector.load %arg2[%c0_1, %c0_2] : memref<256x16xf32, #tpu.memory_space<vmem>>, vector<256x16xf32>
    %cst = arith.constant dense<0.000000e+00> : vector<128x16xf32>
    %3 = tpu.matmul %1, %2, %cst {dimension_numbers = #tpu.dot_dimension_numbers<[1], [0], [0], [1], [0, 0, 1, 1], [], []>} : vector<128x256xf32>, vector<256x16xf32>, vector<128x16xf32> -> vector<128x16xf32>
    %cst_3 = arith.constant 0.000000e+00 : f32
    %4 = vector.broadcast %cst_3 : f32 to vector<128x16xf32>
    %5 = arith.maximumf %3, %4 : vector<128x16xf32>
    %c0_4 = arith.constant 0 : index
    %c0_5 = arith.constant 0 : index
    %6 = vector.load %arg3[%c0_4, %c0_5] : memref<16x16xf32, #tpu.memory_space<vmem>>, vector<16x16xf32>
    %cst_6 = arith.constant dense<0.000000e+00> : vector<128x16xf32>
    %7 = tpu.matmul %5, %6, %cst_6 {dimension_numbers = #tpu.dot_dimension_numbers<[1], [0], [0], [1], [0, 0, 1, 1], [], []>} : vector<128x16xf32>, vector<16x16xf32>, vector<128x16xf32> -> vector<128x16xf32>
    %c0_7 = arith.constant 0 : index
    %c0_8 = arith.constant 0 : index
    %8 = vector.load %arg4[%c0_7, %c0_8] : memref<1x16xf32, #tpu.memory_space<vmem>>, vector<1x16xf32>
    %9 = vector.broadcast %8 : vector<1x16xf32> to vector<128x16xf32>
    %10 = arith.addf %7, %9 : vector<128x16xf32>
    %c0_9 = arith.constant 0 : index
    %c0_10 = arith.constant 0 : index
    %11 = vector.load %arg5[%c0_9, %c0_10] : memref<128x16xf32, #tpu.memory_space<vmem>>, vector<128x16xf32>
    tpu.vector_store %arg5[%c0_9, %c0_10], %10 {strides = array<i32>} : memref<128x16xf32, #tpu.memory_space<vmem>>, vector<128x16xf32>,
    return
  }
  func.func @transform_0(%arg0: i32) -> (i32, i32) {
    %c0_i32 = arith.constant 0 : i32
    %c0_i32_0 = arith.constant 0 : i32
    return %arg0, %c0_i32 : i32, i32
  }
  func.func @transform_1(%arg0: i32) -> (i32, i32) {
    %c0_i32 = arith.constant 0 : i32
    %c0_i32_0 = arith.constant 0 : i32
    %c0_i32_1 = arith.constant 0 : i32
    return %c0_i32, %c0_i32_0 : i32, i32
  }
  func.func @transform_2(%arg0: i32) -> (i32, i32) {
    %c0_i32 = arith.constant 0 : i32
    %c0_i32_0 = arith.constant 0 : i32
    %c0_i32_1 = arith.constant 0 : i32
    return %c0_i32, %c0_i32_0 : i32, i32
  }
  func.func @transform_3(%arg0: i32) -> (i32, i32) {
    %c0_i32 = arith.constant 0 : i32
    %c0_i32_0 = arith.constant 0 : i32
    %c0_i32_1 = arith.constant 0 : i32
    return %c0_i32, %c0_i32_0 : i32, i32
  }
  func.func @transform_4(%arg0: i32) -> (i32, i32) {
    %c0_i32 = arith.constant 0 : i32
    %c0_i32_0 = arith.constant 0 : i32
    return %arg0, %c0_i32 : i32, i32
  }
}

</mosaic_0001>

<llo_original>
// kernel: tpu_custom_call.1
$region0: #{tpu_custom_call.1}
  #allocation0 [shape = 'u32[]', space=smem, size = 0x4, offset = 0x4, fixed_abs, tag = 'smem constant byte address 0x4 - core index']
  #allocation1 [shape = 'u32[72,128]{1,0:T(1,128)}', space=vmem, size = 0x9000, scoped, tag = 'internal scratch']
  %s0 = inlined_call_operand.vmem [shape: bf16[256,256], index: 0, kind: input, shape index: {}]
  %s1 = inlined_call_operand.vmem [shape: f32[256,16], index: 1, kind: input, shape index: {}]
  %s2 = inlined_call_operand.vmem [shape: f32[16,16], index: 2, kind: input, shape index: {}]
  %s3 = inlined_call_operand.vmem [shape: f32[1,16], index: 3, kind: input, shape index: {}]
  %s4 = inlined_call_operand.vmem [shape: f32[256,16], index: 4, kind: output, shape index: {}]
  %s5 = sld [smem:[#allocation0]]
  $region49: #{tpu_custom_call.1} parent=0
    _
  %s7 = ssub.s32 1, %s5
  %s8 = scalar_select 0, %s7, %s5
  loop: start=0, step=1, limit=4
  $region2: #{tpu_custom_call.1} parent=0 // loop_pre_header
    _
  $region3: #{tpu_custom_call.1} parent=0 // loop_header
    %s10 = sphi 0, %s14
    %p11 = scmp.ge.s32.totalorder %s10, 4
    %s20 = sphi 0, %s22
    %s23 = sphi 0, %s20
    %s24 = sphi 0, %s23
    %s40 = sphi 0, %s24
    %s44 = sphi 0, %s44
    %s46 = sphi 0, %s44
    %s47 = sphi 0, %s46
    %s61 = sphi 0, %s47
    %s65 = sphi 0, %s65
    %s67 = sphi 0, %s65
    %s68 = sphi 0, %s67
    %s82 = sphi 0, %s68
    %s86 = sphi 0, %s86
    %s88 = sphi 0, %s86
    %s89 = sphi 0, %s88
    %s103 = sphi 0, %s89
    %s109 = sphi 0, %s111
    %s112 = sphi 0, %s109
    %s113 = sphi 0, %s112
    %s129 = sphi 0, %s113
  $region4: #{tpu_custom_call.1} parent=0 // loop_header_branch
    %13 = sbr.rel (%p11) target = $region8
  $region5: #{tpu_custom_call.1} parent=0 // loop_body
    %s15 = ssub.s32 %s10, 1
    %s16 = ssub.s32 %s10, 2
    %s17 = sadd.s32 %s10, 1
    %s18 = ssub.s32 %s10, %s17
    %p19 = scmp.eq.s32.totalorder %s18, 0
    %s21 = sadd.s32 %s20, 1
    %s22 = scalar_select %p19, %s20, %s21
    %p25 = pneg %p19
    %p26 = scmp.eq.s32.totalorder %s10, 1
    %p27 = por %p25, %p26
    %p28 = scmp.ne.s32.totalorder %s20, %s23
    %p29 = scmp.eq.s32.totalorder %s10, 0
    %p30 = por %p28, %p29
    %p31 = scmp.ne.s32.totalorder %s20, %s23
    %p32 = scmp.eq.s32.totalorder %s15, 1
    %p33 = por %p31, %p32
    %p34 = scmp.ne.s32.totalorder %s23, %s24
    %p35 = scmp.eq.s32.totalorder %s15, 0
    %p36 = por %p34, %p35
    %p37 = scmp.ne.s32.totalorder %s23, %s24
    %p38 = scmp.eq.s32.totalorder %s16, 1
    %p39 = por %p37, %p38
    %p41 = scmp.ne.s32.totalorder %s24, %s40
    %p42 = scmp.eq.s32.totalorder %s16, 0
    %p43 = por %p41, %p42
    %s45 = sadd.s32 %s44, 1
    %p48 = scmp.eq.s32.totalorder %s10, 1
    %p49 = scmp.ne.s32.totalorder %s44, %s46
    %p50 = scmp.eq.s32.totalorder %s10, 0
    %p51 = por %p49, %p50
    %p52 = scmp.ne.s32.totalorder %s44, %s46
    %p53 = scmp.eq.s32.totalorder %s15, 1
    %p54 = por %p52, %p53
    %p55 = scmp.ne.s32.totalorder %s46, %s47
    %p56 = scmp.eq.s32.totalorder %s15, 0
    %p57 = por %p55, %p56
    %p58 = scmp.ne.s32.totalorder %s46, %s47
    %p59 = scmp.eq.s32.totalorder %s16, 1
    %p60 = por %p58, %p59
    %p62 = scmp.ne.s32.totalorder %s47, %s61
    %p63 = scmp.eq.s32.totalorder %s16, 0
    %p64 = por %p62, %p63
    %s66 = sadd.s32 %s65, 1
    %p69 = scmp.eq.s32.totalorder %s10, 1
    %p70 = scmp.ne.s32.totalorder %s65, %s67
    %p71 = scmp.eq.s32.totalorder %s10, 0
    %p72 = por %p70, %p71
    %p73 = scmp.ne.s32.totalorder %s65, %s67
    %p74 = scmp.eq.s32.totalorder %s15, 1
    %p75 = por %p73, %p74
    %p76 = scmp.ne.s32.totalorder %s67, %s68
    %p77 = scmp.eq.s32.totalorder %s15, 0
    %p78 = por %p76, %p77
    %p79 = scmp.ne.s32.totalorder %s67, %s68
    %p80 = scmp.eq.s32.totalorder %s16, 1
    %p81 = por %p79, %p80
    %p83 = scmp.ne.s32.totalorder %s68, %s82
    %p84 = scmp.eq.s32.totalorder %s16, 0
    %p85 = por %p83, %p84
    %s87 = sadd.s32 %s86, 1
    %p90 = scmp.eq.s32.totalorder %s10, 1
    %p91 = scmp.ne.s32.totalorder %s86, %s88
    %p92 = scmp.eq.s32.totalorder %s10, 0
    %p93 = por %p91, %p92
    %p94 = scmp.ne.s32.totalorder %s86, %s88
    %p95 = scmp.eq.s32.totalorder %s15, 1
    %p96 = por %p94, %p95
    %p97 = scmp.ne.s32.totalorder %s88, %s89
    %p98 = scmp.eq.s32.totalorder %s15, 0
    %p99 = por %p97, %p98
    %p100 = scmp.ne.s32.totalorder %s88, %s89
    %p101 = scmp.eq.s32.totalorder %s16, 1
    %p102 = por %p100, %p101
    %p104 = scmp.ne.s32.totalorder %s89, %s103
    %p105 = scmp.eq.s32.totalorder %s16, 0
    %p106 = por %p104, %p105
    %s107 = ssub.s32 %s10, %s17
    %p108 = scmp.eq.s32.totalorder %s107, 0
    %s110 = sadd.s32 %s109, 1
    %s111 = scalar_select %p108, %s109, %s110
    %p114 = pneg %p108
    %p115 = scmp.eq.s32.totalorder %s10, 1
    %p116 = por %p114, %p115
    %p117 = scmp.ne.s32.totalorder %s109, %s112
    %p118 = scmp.eq.s32.totalorder %s10, 0
    %p119 = por %p117, %p118
    %p120 = scmp.ne.s32.totalorder %s109, %s112
    %p121 = scmp.eq.s32.totalorder %s15, 1
    %p122 = por %p120, %p121
    %p123 = scmp.ne.s32.totalorder %s112, %s113
    %p124 = scmp.eq.s32.totalorder %s15, 0
    %p125 = por %p123, %p124
    %p126 = scmp.ne.s32.totalorder %s112, %s113
    %p127 = scmp.eq.s32.totalorder %s16, 1
    %p128 = por %p126, %p127
    %p130 = scmp.ne.s32.totalorder %s113, %s129
    %p131 = scmp.eq.s32.totalorder %s16, 0
    %p132 = por %p130, %p131
    %p133 = scmp.le.s32.totalorder 1, %s10
    %p134 = scmp.lt.s32.totalorder %s10, 3
    %p135 = pnand %p133, %p134
    %p136 = pneg %p135
    // Predicated region
    $region9: #{tpu_custom_call.1} parent=5 // pred_check
      _
    $region10: #{tpu_custom_call.1} parent=5 // pred_check_branch
      %138 = sbr.rel (%p135) target = $region12
    $region11: #{tpu_custom_call.1} parent=5 // pred_region
      %s139 = ssub.s32 %s10, 1
      // Predicated region
      $region13: #{tpu_custom_call.1} parent=11 // pred_check
        %p140 = pneg %p57
      $region14: #{tpu_custom_call.1} parent=11 // pred_check_branch
        %142 = sbr.rel (%p140) target = $region16
      $region15: #{tpu_custom_call.1} parent=11 // pred_region
        _
      $region16: #{tpu_custom_call.1} parent=11 // pred_fallthru
        _
      // Predicated region
      $region17: #{tpu_custom_call.1} parent=11 // pred_check
        %p143 = pneg %p78
      $region18: #{tpu_custom_call.1} parent=11 // pred_check_branch
        %145 = sbr.rel (%p143) target = $region20
      $region19: #{tpu_custom_call.1} parent=11 // pred_region
        _
      $region20: #{tpu_custom_call.1} parent=11 // pred_fallthru
        _
      // Predicated region
      $region21: #{tpu_custom_call.1} parent=11 // pred_check
        %p146 = pneg %p99
      $region22: #{tpu_custom_call.1} parent=11 // pred_check_branch
        %148 = sbr.rel (%p146) target = $region24
      $region23: #{tpu_custom_call.1} parent=11 // pred_region
        _
      $region24: #{tpu_custom_call.1} parent=11 // pred_fallthru
        _
    $region12: #{tpu_custom_call.1} parent=5 // pred_fallthru
      _
    %p149 = scmp.lt.s32.totalorder %s10, 2
    // Predicated region
    $region25: #{tpu_custom_call.1} parent=5 // pred_check
      %p150 = pneg %p149
    $region26: #{tpu_custom_call.1} parent=5 // pred_check_branch
      %152 = sbr.rel (%p150) target = $region28
    $region27: #{tpu_custom_call.1} parent=5 // pred_region
      // Predicated region
      $region29: #{tpu_custom_call.1} parent=27 // pred_check
        %p153 = pneg %p30
      $region30: #{tpu_custom_call.1} parent=27 // pred_check_branch
        %155 = sbr.rel (%p153) target = $region32
      $region31: #{tpu_custom_call.1} parent=27 // pred_region
        %s156 = smul.u32 16, %s10
        %p157 = scmp.lt.s32.totalorder %s156, 31
        %s158 = scalar_select %p157, %s156, 31
        %s159 = smul.addr %s158, 2
        %s160 = smul.addr %s159, 4
        %s161 = scalar_lea.vmem %s0, %s160
        %s162 = smul.u32 16, %s10
      $region32: #{tpu_custom_call.1} parent=27 // pred_fallthru
        _
    $region28: #{tpu_custom_call.1} parent=5 // pred_fallthru
      _
    %p163 = scmp.le.s32.totalorder 1, %s10
    %p164 = scmp.lt.s32.totalorder %s10, 3
    %p165 = pnand %p163, %p164
    %p166 = pneg %p165
    // Predicated region
    $region33: #{tpu_custom_call.1} parent=5 // pred_check
      _
    $region34: #{tpu_custom_call.1} parent=5 // pred_check_branch
      %168 = sbr.rel (%p165) target = $region36
    $region35: #{tpu_custom_call.1} parent=5 // pred_region
      %s169 = ssub.s32 %s10, 1
      %s170 = smul.u32 16, %s15
      %p171 = scmp.lt.s32.totalorder %s170, 31
      %s172 = scalar_select %p171, %s170, 31
      %s173 = smul.addr %s172, 2
      %s174 = smul.addr %s173, 4
      %s175 = scalar_lea.vmem %s0, %s174
      %p176 = pneg %p36
      %p177 = pneg %p33
      %p178 = pneg %p57
      %p179 = pneg %p54
      %p180 = pneg %p78
      %p181 = pneg %p75
      %p182 = pneg %p99
      %p183 = pneg %p96
      %p184 = pneg %p125
      %p185 = pneg %p122
      %s186 = smul.u32 16, %s15
      %p187 = scmp.lt.s32.totalorder %s186, 31
      %s188 = scalar_select %p187, %s186, 31
      %s189 = smul.addr %s188, 8
      %s190 = scalar_lea.vmem %s4, %s189
      %s191 = smul.u32 16, %s15
      %p192 = scmp.lt.s32.totalorder %s191, 31
      %s193 = scalar_select %p192, %s191, 31
      %s194 = smul.addr %s193, 2
      %s195 = smul.addr %s194, 4
      %s196 = scalar_lea.vmem %s0, %s195
      %s197 = smul.u32 16, %s15
      %s198 = smul.u32 16, %s15
      %p199 = scmp.lt.s32.totalorder %s198, 31
      %s200 = scalar_select %p199, %s198, 31
      %s201 = smul.addr %s200, 8
      %s202 = scalar_lea.vmem %s4, %s201
      %s203 = smul.u32 16, %s15
      %v204 = vld [vmem:[%s196] sm:$0xff]
      %v205 = vld [vmem:[%s196 + $0x8] sm:$0xff]
      %v206 = vld [vmem:[%s196 + $0x10] sm:$0xff]
      %v207 = vld [vmem:[%s196 + $0x18] sm:$0xff]
      %v208 = vld [vmem:[%s196 + $0x20] sm:$0xff]
      %v209 = vld [vmem:[%s196 + $0x28] sm:$0xff]
      %v210 = vld [vmem:[%s196 + $0x30] sm:$0xff]
      %v211 = vld [vmem:[%s196 + $0x38] sm:$0xff]
      %v212 = vld [vmem:[%s196 + $0x40] sm:$0xff]
      %v213 = vld [vmem:[%s196 + $0x48] sm:$0xff]
      %v214 = vld [vmem:[%s196 + $0x50] sm:$0xff]
      %v215 = vld [vmem:[%s196 + $0x58] sm:$0xff]
      %v216 = vld [vmem:[%s196 + $0x60] sm:$0xff]
      %v217 = vld [vmem:[%s196 + $0x68] sm:$0xff]
      %v218 = vld [vmem:[%s196 + $0x70] sm:$0xff]
      %v219 = vld [vmem:[%s196 + $0x78] sm:$0xff]
      %v220 = vunpack.c.l.bf16 %v204
      %v221 = vunpack.c.h.bf16 %v204
      %v222 = vunpack.c.l.bf16 %v205
      %v223 = vunpack.c.h.bf16 %v205
      %v224 = vunpack.c.l.bf16 %v206
      %v225 = vunpack.c.h.bf16 %v206
      %v226 = vunpack.c.l.bf16 %v207
      %v227 = vunpack.c.h.bf16 %v207
      %v228 = vunpack.c.l.bf16 %v208
      %v229 = vunpack.c.h.bf16 %v208
      %v230 = vunpack.c.l.bf16 %v209
      %v231 = vunpack.c.h.bf16 %v209
      %v232 = vunpack.c.l.bf16 %v210
      %v233 = vunpack.c.h.bf16 %v210
      %v234 = vunpack.c.l.bf16 %v211
      %v235 = vunpack.c.h.bf16 %v211
      %v236 = vunpack.c.l.bf16 %v212
      %v237 = vunpack.c.h.bf16 %v212
      %v238 = vunpack.c.l.bf16 %v213
      %v239 = vunpack.c.h.bf16 %v213
      %v240 = vunpack.c.l.bf16 %v214
      %v241 = vunpack.c.h.bf16 %v214
      %v242 = vunpack.c.l.bf16 %v215
      %v243 = vunpack.c.h.bf16 %v215
      %v244 = vunpack.c.l.bf16 %v216
      %v245 = vunpack.c.h.bf16 %v216
      %v246 = vunpack.c.l.bf16 %v217
      %v247 = vunpack.c.h.bf16 %v217
      %v248 = vunpack.c.l.bf16 %v218
      %v249 = vunpack.c.h.bf16 %v218
      %v250 = vunpack.c.l.bf16 %v219
      %v251 = vunpack.c.h.bf16 %v219
      %v252 = vld [vmem:[%s1] sm:$0xff]
      %v253 = vld [vmem:[%s1 + $0x8] sm:$0xff]
      %v254 = vld [vmem:[%s1 + $0x10] sm:$0xff]
      %v255 = vld [vmem:[%s1 + $0x18] sm:$0xff]
      %v256 = vld [vmem:[%s1 + $0x20] sm:$0xff]
      %v257 = vld [vmem:[%s1 + $0x28] sm:$0xff]
      %v258 = vld [vmem:[%s1 + $0x30] sm:$0xff]
      %v259 = vld [vmem:[%s1 + $0x38] sm:$0xff]
      %v260 = vld [vmem:[%s1 + $0x40] sm:$0xff]
      %v261 = vld [vmem:[%s1 + $0x48] sm:$0xff]
      %v262 = vld [vmem:[%s1 + $0x50] sm:$0xff]
      %v263 = vld [vmem:[%s1 + $0x58] sm:$0xff]
      %v264 = vld [vmem:[%s1 + $0x60] sm:$0xff]
      %v265 = vld [vmem:[%s1 + $0x68] sm:$0xff]
      %v266 = vld [vmem:[%s1 + $0x70] sm:$0xff]
      %v267 = vld [vmem:[%s1 + $0x78] sm:$0xff]
      %v268 = vld [vmem:[%s1 + $0x80] sm:$0xff]
      %v269 = vld [vmem:[%s1 + $0x88] sm:$0xff]
      %v270 = vld [vmem:[%s1 + $0x90] sm:$0xff]
      %v271 = vld [vmem:[%s1 + $0x98] sm:$0xff]
      %v272 = vld [vmem:[%s1 + $0xa0] sm:$0xff]
      %v273 = vld [vmem:[%s1 + $0xa8] sm:$0xff]
      %v274 = vld [vmem:[%s1 + $0xb0] sm:$0xff]
      %v275 = vld [vmem:[%s1 + $0xb8] sm:$0xff]
      %v276 = vld [vmem:[%s1 + $0xc0] sm:$0xff]
      %v277 = vld [vmem:[%s1 + $0xc8] sm:$0xff]
      %v278 = vld [vmem:[%s1 + $0xd0] sm:$0xff]
      %v279 = vld [vmem:[%s1 + $0xd8] sm:$0xff]
      %v280 = vld [vmem:[%s1 + $0xe0] sm:$0xff]
      %v281 = vld [vmem:[%s1 + $0xe8] sm:$0xff]
      %v282 = vld [vmem:[%s1 + $0xf0] sm:$0xff]
      %v283 = vld [vmem:[%s1 + $0xf8] sm:$0xff]
      %284 = vmatpush.msra.mxu0 %v267
      %285 = vmatpush.msra.mxu0 %v266
      %286 = vmatpush.msra.mxu0 %v265
      %287 = vmatpush.msra.mxu0 %v264
      %288 = vmatpush.msra.mxu0 %v263
      %289 = vmatpush.msra.mxu0 %v262
      %290 = vmatpush.msra.mxu0 %v261
      %291 = vmatpush.msra.mxu0 %v260
      %292 = vmatpush.msra.mxu0 %v259
      %293 = vmatpush.msra.mxu0 %v258
      %294 = vmatpush.msra.mxu0 %v257
      %295 = vmatpush.msra.mxu0 %v256
      %296 = vmatpush.msra.mxu0 %v255
      %297 = vmatpush.msra.mxu0 %v254
      %298 = vmatpush.msra.mxu0 %v253
      %299 = vmatpush.msra.mxu0 %v252
      %300 = vmatmul.f32.gmra.mxu0 %v220
      %v301 = vpop.f32.mrf.mxu0
      %v302 = vadd.f32 0.0, %v301
      %303 = vmatmul.f32.gmra.mxu0 %v222
      %v304 = vpop.f32.mrf.mxu0
      %v305 = vadd.f32 0.0, %v304
      %306 = vmatmul.f32.gmra.mxu0 %v224
      %v307 = vpop.f32.mrf.mxu0
      %v308 = vadd.f32 0.0, %v307
      %309 = vmatmul.f32.gmra.mxu0 %v226
      %v310 = vpop.f32.mrf.mxu0
      %v311 = vadd.f32 0.0, %v310
      %312 = vmatmul.f32.gmra.mxu0 %v228
      %v313 = vpop.f32.mrf.mxu0
      %v314 = vadd.f32 0.0, %v313
      %315 = vmatmul.f32.gmra.mxu0 %v230
      %v316 = vpop.f32.mrf.mxu0
      %v317 = vadd.f32 0.0, %v316
      %318 = vmatmul.f32.gmra.mxu0 %v232
      %v319 = vpop.f32.mrf.mxu0
      %v320 = vadd.f32 0.0, %v319
      %321 = vmatmul.f32.gmra.mxu0 %v234
      %v322 = vpop.f32.mrf.mxu0
      %v323 = vadd.f32 0.0, %v322
      %324 = vmatmul.f32.gmra.mxu0 %v236
      %v325 = vpop.f32.mrf.mxu0
      %v326 = vadd.f32 0.0, %v325
      %327 = vmatmul.f32.gmra.mxu0 %v238
      %v328 = vpop.f32.mrf.mxu0
      %v329 = vadd.f32 0.0, %v328
      %330 = vmatmul.f32.gmra.mxu0 %v240
      %v331 = vpop.f32.mrf.mxu0
      %v332 = vadd.f32 0.0, %v331
      %333 = vmatmul.f32.gmra.mxu0 %v242
      %v334 = vpop.f32.mrf.mxu0
      %v335 = vadd.f32 0.0, %v334
      %336 = vmatmul.f32.gmra.mxu0 %v244
      %v337 = vpop.f32.mrf.mxu0
      %v338 = vadd.f32 0.0, %v337
      %339 = vmatmul.f32.gmra.mxu0 %v246
      %v340 = vpop.f32.mrf.mxu0
      %v341 = vadd.f32 0.0, %v340
      %342 = vmatmul.f32.gmra.mxu0 %v248
      %v343 = vpop.f32.mrf.mxu0
      %v344 = vadd.f32 0.0, %v343
      %345 = vmatmul.f32.gmra.mxu0 %v250
      %v346 = vpop.f32.mrf.mxu0
      %v347 = vadd.f32 0.0, %v346
      %348 = vdwg.mxu0
      %349 = vmatpush.msra.mxu0 %v283
      %350 = vmatpush.msra.mxu0 %v282
      %351 = vmatpush.msra.mxu0 %v281
      %352 = vmatpush.msra.mxu0 %v280
      %353 = vmatpush.msra.mxu0 %v279
      %354 = vmatpush.msra.mxu0 %v278
      %355 = vmatpush.msra.mxu0 %v277
      %356 = vmatpush.msra.mxu0 %v276
      %357 = vmatpush.msra.mxu0 %v275
      %358 = vmatpush.msra.mxu0 %v274
      %359 = vmatpush.msra.mxu0 %v273
      %360 = vmatpush.msra.mxu0 %v272
      %361 = vmatpush.msra.mxu0 %v271
      %362 = vmatpush.msra.mxu0 %v270
      %363 = vmatpush.msra.mxu0 %v269
      %364 = vmatpush.msra.mxu0 %v268
      %365 = vmatmul.f32.gmra.mxu0 %v221
      %v366 = vpop.f32.mrf.mxu0
      %v367 = vadd.f32 %v302, %v366
      %368 = vmatmul.f32.gmra.mxu0 %v223
      %v369 = vpop.f32.mrf.mxu0
      %v370 = vadd.f32 %v305, %v369
      %371 = vmatmul.f32.gmra.mxu0 %v225
      %v372 = vpop.f32.mrf.mxu0
      %v373 = vadd.f32 %v308, %v372
      %374 = vmatmul.f32.gmra.mxu0 %v227
      %v375 = vpop.f32.mrf.mxu0
      %v376 = vadd.f32 %v311, %v375
      %377 = vmatmul.f32.gmra.mxu0 %v229
      %v378 = vpop.f32.mrf.mxu0
      %v379 = vadd.f32 %v314, %v378
      %380 = vmatmul.f32.gmra.mxu0 %v231
      %v381 = vpop.f32.mrf.mxu0
      %v382 = vadd.f32 %v317, %v381
      %383 = vmatmul.f32.gmra.mxu0 %v233
      %v384 = vpop.f32.mrf.mxu0
      %v385 = vadd.f32 %v320, %v384
      %386 = vmatmul.f32.gmra.mxu0 %v235
      %v387 = vpop.f32.mrf.mxu0
      %v388 = vadd.f32 %v323, %v387
      %389 = vmatmul.f32.gmra.mxu0 %v237
      %v390 = vpop.f32.mrf.mxu0
      %v391 = vadd.f32 %v326, %v390
      %392 = vmatmul.f32.gmra.mxu0 %v239
      %v393 = vpop.f32.mrf.mxu0
      %v394 = vadd.f32 %v329, %v393
      %395 = vmatmul.f32.gmra.mxu0 %v241
      %v396 = vpop.f32.mrf.mxu0
      %v397 = vadd.f32 %v332, %v396
      %398 = vmatmul.f32.gmra.mxu0 %v243
      %v399 = vpop.f32.mrf.mxu0
      %v400 = vadd.f32 %v335, %v399
      %401 = vmatmul.f32.gmra.mxu0 %v245
      %v402 = vpop.f32.mrf.mxu0
      %v403 = vadd.f32 %v338, %v402
      %404 = vmatmul.f32.gmra.mxu0 %v247
      %v405 = vpop.f32.mrf.mxu0
      %v406 = vadd.f32 %v341, %v405
      %407 = vmatmul.f32.gmra.mxu0 %v249
      %v408 = vpop.f32.mrf.mxu0
      %v409 = vadd.f32 %v344, %v408
      %410 = vmatmul.f32.gmra.mxu0 %v251
      %v411 = vpop.f32.mrf.mxu0
      %v412 = vadd.f32 %v347, %v411
      %413 = vdwg.mxu0
      %v414 = vmax.f32 %v367, 0.0
      %v415 = vmax.f32 %v370, 0.0
      %v416 = vmax.f32 %v373, 0.0
      %v417 = vmax.f32 %v376, 0.0
      %v418 = vmax.f32 %v379, 0.0
      %v419 = vmax.f32 %v382, 0.0
      %v420 = vmax.f32 %v385, 0.0
      %v421 = vmax.f32 %v388, 0.0
      %v422 = vmax.f32 %v391, 0.0
      %v423 = vmax.f32 %v394, 0.0
      %v424 = vmax.f32 %v397, 0.0
      %v425 = vmax.f32 %v400, 0.0
      %v426 = vmax.f32 %v403, 0.0
      %v427 = vmax.f32 %v406, 0.0
      %v428 = vmax.f32 %v409, 0.0
      %v429 = vmax.f32 %v412, 0.0
      %v430 = vld [vmem:[%s2] sm:$0xff]
      %v431 = vld [vmem:[%s2 + $0x8] sm:$0xff]
      %v432 = vld [vmem:[%s3] sm:$0x1]
      %v434 = vperm.slane %v432, 0
      %vm436 = vcmask 130048
      %v438 = vsel %vm436, %v414, 0
      %v441 = vsel %vm436, %v415, 0
      %v444 = vsel %vm436, %v416, 0
      %v447 = vsel %vm436, %v417, 0
      %v450 = vsel %vm436, %v418, 0
      %v453 = vsel %vm436, %v419, 0
      %v456 = vsel %vm436, %v420, 0
      %v459 = vsel %vm436, %v421, 0
      %v462 = vsel %vm436, %v422, 0
      %v465 = vsel %vm436, %v423, 0
      %v468 = vsel %vm436, %v424, 0
      %v471 = vsel %vm436, %v425, 0
      %v474 = vsel %vm436, %v426, 0
      %v477 = vsel %vm436, %v427, 0
      %v480 = vsel %vm436, %v428, 0
      %v483 = vsel %vm436, %v429, 0
      %485 = vmatpush.msra.mxu0 0.0
      %486 = vmatpush.msra.mxu0 0.0
      %487 = vmatpush.msra.mxu0 0.0
      %488 = vmatpush.msra.mxu0 0.0
      %489 = vmatpush.msra.mxu0 0.0
      %490 = vmatpush.msra.mxu0 0.0
      %491 = vmatpush.msra.mxu0 0.0
      %492 = vmatpush.msra.mxu0 0.0
      %493 = vmatpush.msra.mxu0 0.0
      %494 = vmatpush.msra.mxu0 0.0
      %495 = vmatpush.msra.mxu0 0.0
      %496 = vmatpush.msra.mxu0 0.0
      %497 = vmatpush.msra.mxu0 0.0
      %498 = vmatpush.msra.mxu0 0.0
      %499 = vmatpush.msra.mxu0 %v431
      %500 = vmatpush.msra.mxu0 %v430
      %501 = vmatmul.f32.gmra.mxu0 %v438
      %v502 = vpop.f32.mrf.mxu0
      %v503 = vadd.f32 %v434, %v502
      %504 = vmatmul.f32.gmra.mxu0 %v441
      %v505 = vpop.f32.mrf.mxu0
      %v506 = vadd.f32 %v434, %v505
      %507 = vmatmul.f32.gmra.mxu0 %v444
      %v508 = vpop.f32.mrf.mxu0
      %v509 = vadd.f32 %v434, %v508
      %510 = vmatmul.f32.gmra.mxu0 %v447
      %v511 = vpop.f32.mrf.mxu0
      %v512 = vadd.f32 %v434, %v511
      %513 = vmatmul.f32.gmra.mxu0 %v450
      %v514 = vpop.f32.mrf.mxu0
      %v515 = vadd.f32 %v434, %v514
      %516 = vmatmul.f32.gmra.mxu0 %v453
      %v517 = vpop.f32.mrf.mxu0
      %v518 = vadd.f32 %v434, %v517
      %519 = vmatmul.f32.gmra.mxu0 %v456
      %v520 = vpop.f32.mrf.mxu0
      %v521 = vadd.f32 %v434, %v520
      %522 = vmatmul.f32.gmra.mxu0 %v459
      %v523 = vpop.f32.mrf.mxu0
      %v524 = vadd.f32 %v434, %v523
      %525 = vmatmul.f32.gmra.mxu0 %v462
      %v526 = vpop.f32.mrf.mxu0
      %v527 = vadd.f32 %v434, %v526
      %528 = vmatmul.f32.gmra.mxu0 %v465
      %v529 = vpop.f32.mrf.mxu0
      %v530 = vadd.f32 %v434, %v529
      %531 = vmatmul.f32.gmra.mxu0 %v468
      %v532 = vpop.f32.mrf.mxu0
      %v533 = vadd.f32 %v434, %v532
      %534 = vmatmul.f32.gmra.mxu0 %v471
      %v535 = vpop.f32.mrf.mxu0
      %v536 = vadd.f32 %v434, %v535
      %537 = vmatmul.f32.gmra.mxu0 %v474
      %v538 = vpop.f32.mrf.mxu0
      %v539 = vadd.f32 %v434, %v538
      %540 = vmatmul.f32.gmra.mxu0 %v477
      %v541 = vpop.f32.mrf.mxu0
      %v542 = vadd.f32 %v434, %v541
      %543 = vmatmul.f32.gmra.mxu0 %v480
      %v544 = vpop.f32.mrf.mxu0
      %v545 = vadd.f32 %v434, %v544
      %546 = vmatmul.f32.gmra.mxu0 %v483
      %v547 = vpop.f32.mrf.mxu0
      %v548 = vadd.f32 %v434, %v547
      %549 = vdwg.mxu0
      %550 = vst.msk [vmem:[%s202] sm:$0xff] %vm436, %v503
      %551 = vst.msk [vmem:[%s202 + $0x8] sm:$0xff] %vm436, %v506
      %552 = vst.msk [vmem:[%s202 + $0x10] sm:$0xff] %vm436, %v509
      %553 = vst.msk [vmem:[%s202 + $0x18] sm:$0xff] %vm436, %v512
      %554 = vst.msk [vmem:[%s202 + $0x20] sm:$0xff] %vm436, %v515
      %555 = vst.msk [vmem:[%s202 + $0x28] sm:$0xff] %vm436, %v518
      %556 = vst.msk [vmem:[%s202 + $0x30] sm:$0xff] %vm436, %v521
      %557 = vst.msk [vmem:[%s202 + $0x38] sm:$0xff] %vm436, %v524
      %558 = vst.msk [vmem:[%s202 + $0x40] sm:$0xff] %vm436, %v527
      %559 = vst.msk [vmem:[%s202 + $0x48] sm:$0xff] %vm436, %v530
      %560 = vst.msk [vmem:[%s202 + $0x50] sm:$0xff] %vm436, %v533
      %561 = vst.msk [vmem:[%s202 + $0x58] sm:$0xff] %vm436, %v536
      %562 = vst.msk [vmem:[%s202 + $0x60] sm:$0xff] %vm436, %v539
      %563 = vst.msk [vmem:[%s202 + $0x68] sm:$0xff] %vm436, %v542
      %564 = vst.msk [vmem:[%s202 + $0x70] sm:$0xff] %vm436, %v545
      %565 = vst.msk [vmem:[%s202 + $0x78] sm:$0xff] %vm436, %v548
      %s566 = smul.u32 16, %s15
      %p567 = scmp.lt.s32.totalorder %s566, 31
      %s568 = scalar_select %p567, %s566, 31
      %s569 = smul.addr %s568, 8
      %s570 = scalar_lea.vmem %s4, %s569
      // Predicated region
      $region37: #{tpu_custom_call.1} parent=35 // pred_check
        %p571 = pneg %p122
      $region38: #{tpu_custom_call.1} parent=35 // pred_check_branch
        %573 = sbr.rel (%p571) target = $region40
      $region39: #{tpu_custom_call.1} parent=35 // pred_region
        %s574 = smul.u32 16, %s15
      $region40: #{tpu_custom_call.1} parent=35 // pred_fallthru
        _
    $region36: #{tpu_custom_call.1} parent=5 // pred_fallthru
      _
    %p575 = scmp.le.s32.totalorder 2, %s10
    // Predicated region
    $region41: #{tpu_custom_call.1} parent=5 // pred_check
      %p576 = pneg %p575
    $region42: #{tpu_custom_call.1} parent=5 // pred_check_branch
      %578 = sbr.rel (%p576) target = $region44
    $region43: #{tpu_custom_call.1} parent=5 // pred_region
      %s579 = ssub.s32 %s10, 2
      // Predicated region
      $region45: #{tpu_custom_call.1} parent=43 // pred_check
        %p580 = pneg %p128
      $region46: #{tpu_custom_call.1} parent=43 // pred_check_branch
        %582 = sbr.rel (%p580) target = $region48
      $region47: #{tpu_custom_call.1} parent=43 // pred_region
        %s583 = smul.u32 16, %s16
        %p584 = scmp.lt.s32.totalorder %s583, 31
        %s585 = scalar_select %p584, %s583, 31
        %s586 = smul.addr %s585, 8
        %s587 = scalar_lea.vmem %s4, %s586
      $region48: #{tpu_custom_call.1} parent=43 // pred_fallthru
        _
    $region44: #{tpu_custom_call.1} parent=5 // pred_fallthru
      _
  $region6: #{tpu_custom_call.1} parent=0 // loop_footer
    %s14 = sadd.s32 1, %s10
  $region7: #{tpu_custom_call.1} parent=0 // loop_footer_branch
    %9 = sbr.rel target = $region3
  $region8: #{tpu_custom_call.1} parent=0 // loop_exit
    _

</llo_original>
